<compile_context>
chip_gen: v7x
topology: tpu7x:2x2x1
jax: 0.10.0
libtpu: 0.0.40
codegen_flags: <defaults>
</compile_context>

<pallas_src>
import jax
import jax.numpy as jnp
from jax.experimental import pallas as pl
from jax.experimental.pallas import tpu as pltpu


def _round_up(n, m):
    return ((n + m - 1) // m) * m


def mlp_kernel(x_ref, w1_ref, w2_ref, w3_ref, b1_ref, b2_ref, b3_ref, o_ref):
    """Fused 3-layer MLP on one (tb, din) row tile.

    x_ref : (tb, din)      activations (compute dtype)
    w1_ref: (din, d1p)     layer-1 weight, output dim padded to 128 granule
    w2_ref: (d1p, d2p)     layer-2 weight, zero-padded rows/cols
    w3_ref: (d2p, dout)    head weight, K padded, N = true dout
    b*_ref: (1, d1p/d2p/dout)  biases (f32)
    o_ref : (tb, dout)     output tile (x.dtype)
    """
    cdt = w1_ref.dtype

    # linear1 + relu  (f32 accumulation on the MXU, f32 bias add / ReLU)
    h = jnp.dot(x_ref[...], w1_ref[...], preferred_element_type=jnp.float32)
    h = jnp.maximum(h + b1_ref[...], 0.0)

    # linear2 + relu
    h = jnp.dot(h.astype(cdt), w2_ref[...], preferred_element_type=jnp.float32)
    h = jnp.maximum(h + b2_ref[...], 0.0)

    # head
    out = jnp.dot(h.astype(cdt), w3_ref[...], preferred_element_type=jnp.float32)
    out = out + b3_ref[...]
    o_ref[...] = out.astype(o_ref.dtype)


def pack_params(params, compute_dtype=jnp.bfloat16):
    """Pad weights per-layer (hidden dims to 128 lanes) ONCE; keep biases f32.

    Call this once at init / model load time and reuse the result — do not
    rebuild the padded stack every forward call.
    """
    w1, b1 = params["w1"], params["b1"]
    w2, b2 = params["w2"], params["b2"]
    w3, b3 = params["w3"], params["b3"]
    din, d1 = w1.shape
    d2 = w2.shape[1]
    dout = w3.shape[1]
    d1p = _round_up(d1, 128)
    d2p = _round_up(d2, 128)
    cdt = compute_dtype

    w1p = jnp.zeros((din, d1p), cdt).at[:, :d1].set(w1.astype(cdt))
    w2p = jnp.zeros((d1p, d2p), cdt).at[:d1, :d2].set(w2.astype(cdt))
    w3p = jnp.zeros((d2p, dout), cdt).at[:d2, :].set(w3.astype(cdt))

    b1p = jnp.zeros((1, d1p), jnp.float32).at[:, :d1].set(
        b1.astype(jnp.float32).reshape(1, d1))
    b2p = jnp.zeros((1, d2p), jnp.float32).at[:, :d2].set(
        b2.astype(jnp.float32).reshape(1, d2))
    b3p = b3.astype(jnp.float32).reshape(1, dout)

    return {"w1": w1p, "w2": w2p, "w3": w3p, "b1": b1p, "b2": b2p, "b3": b3p}


def model_nes_forward(x, packed, *, row_tile=4096):
    """x: (B, din).  packed: output of pack_params()."""
    w1p, w2p, w3p = packed["w1"], packed["w2"], packed["w3"]
    b1p, b2p, b3p = packed["b1"], packed["b2"], packed["b3"]
    cdt = w1p.dtype

    B, din = x.shape
    assert din == w1p.shape[0], "input dim mismatch with packed params"
    dout = w3p.shape[1]

    # Batch tile: multiple of 8 sublanes, large (default 4096 rows) to amortize
    # per-grid-step overhead; for large batches cap at ~half the batch so the
    # grid has >=2 steps and both v7x TensorCores are used.
    b8 = _round_up(B, 8)
    tb = min(row_tile, b8)
    half = _round_up((b8 + 1) // 2, 8)
    if half >= 512:
        tb = min(tb, half)
    Bp = _round_up(B, tb)

    x_in = x.astype(cdt)
    if Bp != B:
        x_in = jnp.zeros((Bp, din), cdt).at[:B].set(x_in)

    grid = (Bp // tb,)

    flops = 2 * B * (din * w1p.shape[1]
                     + w2p.shape[0] * w2p.shape[1]
                     + w3p.shape[0] * dout)
    bytes_accessed = (
        x_in.size * x_in.dtype.itemsize
        + sum(a.size * a.dtype.itemsize for a in (w1p, w2p, w3p, b1p, b2p, b3p))
        + Bp * dout * jnp.dtype(x.dtype).itemsize)

    const = lambda i: (0, 0)
    out = pl.pallas_call(
        mlp_kernel,
        out_shape=jax.ShapeDtypeStruct((Bp, dout), x.dtype),
        grid=grid,
        in_specs=[
            pl.BlockSpec((tb, din), lambda i: (i, 0)),   # activations: streamed
            pl.BlockSpec(w1p.shape, const),              # weights/biases:
            pl.BlockSpec(w2p.shape, const),              #   constant index ->
            pl.BlockSpec(w3p.shape, const),              #   fetched once,
            pl.BlockSpec(b1p.shape, const),              #   VMEM-resident
            pl.BlockSpec(b2p.shape, const),
            pl.BlockSpec(b3p.shape, const),
        ],
        out_specs=pl.BlockSpec((tb, dout), lambda i: (i, 0)),
        compiler_params=pltpu.CompilerParams(
            dimension_semantics=("parallel",)),          # both TCs on v7x
        cost_estimate=pl.CostEstimate(
            flops=flops, transcendentals=0, bytes_accessed=bytes_accessed),
    )(x_in, w1p, w2p, w3p, b1p, b2p, b3p)

    return out[:B] if Bp != B else out


def init_params(key, input_dim, output_dim):
    """Deterministic init matching nn.Linear shapes (stored transposed: (in, out))."""
    dims = [(input_dim, 32), (32, 48), (48, output_dim)]
    params = {}
    for i, (din, dout) in enumerate(dims, start=1):
        key, kw, kb = jax.random.split(key, 3)
        bound = 1.0 / jnp.sqrt(din)
        params[f"w{i}"] = jax.random.uniform(
            kw, (din, dout), jnp.float32, minval=-bound, maxval=bound)
        params[f"b{i}"] = jax.random.uniform(
            kb, (1, dout), jnp.float32, minval=-bound, maxval=bound)
    return params


def reference_forward(x, params):
    h1 = jnp.maximum(x @ params["w1"] + params["b1"], 0.0)
    h2 = jnp.maximum(h1 @ params["w2"] + params["b2"], 0.0)
    return h2 @ params["w3"] + params["b3"]


if __name__ == "__main__":
    key = jax.random.PRNGKey(0)
    B, input_dim, output_dim = 8, 16, 8

    key, kx = jax.random.split(key)
    x = jax.random.normal(kx, (B, input_dim), jnp.float32)
    params = init_params(key, input_dim, output_dim)
    ref = reference_forward(x, params)

    # f32 operands: strict correctness check.
    packed_f32 = pack_params(params, compute_dtype=jnp.float32)
    out_f32 = jax.block_until_ready(model_nes_forward(x, packed_f32))
    assert out_f32.shape == (B, output_dim)
    assert jnp.allclose(out_f32, ref, atol=1e-4, rtol=1e-4), "f32 mismatch vs reference"

    # bf16 operands (default for serving): f32 accumulation, looser tolerance.
    packed_bf16 = pack_params(params, compute_dtype=jnp.bfloat16)
    out_bf16 = jax.block_until_ready(model_nes_forward(x, packed_bf16))
    assert out_bf16.shape == (B, output_dim)
    assert jnp.allclose(out_bf16, ref, atol=5e-2, rtol=5e-2), "bf16 mismatch vs reference"

    print("KERNEL_OK")
</pallas_src>

<mosaic_0001>
module attributes {stable_mosaic.version = 11 : i64} {
  func.func @mlp_kernel(%arg0: i32, %arg1: memref<8x16xf32, #tpu.memory_space<vmem>>, %arg2: memref<16x128xf32, #tpu.memory_space<vmem>>, %arg3: memref<128x128xf32, #tpu.memory_space<vmem>>, %arg4: memref<128x8xf32, #tpu.memory_space<vmem>>, %arg5: memref<1x128xf32, #tpu.memory_space<vmem>>, %arg6: memref<1x128xf32, #tpu.memory_space<vmem>>, %arg7: memref<1x8xf32, #tpu.memory_space<vmem>>, %arg8: memref<8x8xf32, #tpu.memory_space<vmem>>) attributes {dimension_semantics = [#tpu.dimension_semantics<parallel>], iteration_bounds = array<i64: 1>, scalar_prefetch = 0 : i64, scratch_operands = 0 : i64, tpu.core_type = #tpu.core_type<tc>, window_params = [{transform_indices = @transform_0, window_bounds = array<i64: 8, 16>}, {pipeline_mode = #tpu.pipeline_mode<synchronous>, transform_indices = @transform_1, window_bounds = array<i64: 16, 128>}, {pipeline_mode = #tpu.pipeline_mode<synchronous>, transform_indices = @transform_2, window_bounds = array<i64: 128, 128>}, {pipeline_mode = #tpu.pipeline_mode<synchronous>, transform_indices = @transform_3, window_bounds = array<i64: 128, 8>}, {pipeline_mode = #tpu.pipeline_mode<synchronous>, transform_indices = @transform_4, window_bounds = array<i64: 1, 128>}, {pipeline_mode = #tpu.pipeline_mode<synchronous>, transform_indices = @transform_5, window_bounds = array<i64: 1, 128>}, {pipeline_mode = #tpu.pipeline_mode<synchronous>, transform_indices = @transform_6, window_bounds = array<i64: 1, 8>}, {transform_indices = @transform_7, window_bounds = array<i64: 8, 8>}]} {
    %c0 = arith.constant 0 : index
    %c0_0 = arith.constant 0 : index
    %0 = vector.load %arg1[%c0, %c0_0] : memref<8x16xf32, #tpu.memory_space<vmem>>, vector<8x16xf32>
    %c0_1 = arith.constant 0 : index
    %c0_2 = arith.constant 0 : index
    %1 = vector.load %arg2[%c0_1, %c0_2] : memref<16x128xf32, #tpu.memory_space<vmem>>, vector<16x128xf32>
    %cst = arith.constant dense<0.000000e+00> : vector<8x128xf32>
    %2 = tpu.matmul %0, %1, %cst {dimension_numbers = #tpu.dot_dimension_numbers<[1], [0], [0], [1], [0, 0, 1, 1], [], []>} : vector<8x16xf32>, vector<16x128xf32>, vector<8x128xf32> -> vector<8x128xf32>
    %c0_3 = arith.constant 0 : index
    %c0_4 = arith.constant 0 : index
    %3 = vector.load %arg5[%c0_3, %c0_4] : memref<1x128xf32, #tpu.memory_space<vmem>>, vector<1x128xf32>
    %4 = vector.broadcast %3 : vector<1x128xf32> to vector<8x128xf32>
    %5 = arith.addf %2, %4 : vector<8x128xf32>
    %cst_5 = arith.constant 0.000000e+00 : f32
    %6 = vector.broadcast %cst_5 : f32 to vector<8x128xf32>
    %7 = arith.maximumf %5, %6 : vector<8x128xf32>
    %c0_6 = arith.constant 0 : index
    %c0_7 = arith.constant 0 : index
    %8 = vector.load %arg3[%c0_6, %c0_7] : memref<128x128xf32, #tpu.memory_space<vmem>>, vector<128x128xf32>
    %cst_8 = arith.constant dense<0.000000e+00> : vector<8x128xf32>
    %9 = tpu.matmul %7, %8, %cst_8 {dimension_numbers = #tpu.dot_dimension_numbers<[1], [0], [0], [1], [0, 0, 1, 1], [], []>} : vector<8x128xf32>, vector<128x128xf32>, vector<8x128xf32> -> vector<8x128xf32>
    %c0_9 = arith.constant 0 : index
    %c0_10 = arith.constant 0 : index
    %10 = vector.load %arg6[%c0_9, %c0_10] : memref<1x128xf32, #tpu.memory_space<vmem>>, vector<1x128xf32>
    %11 = vector.broadcast %10 : vector<1x128xf32> to vector<8x128xf32>
    %12 = arith.addf %9, %11 : vector<8x128xf32>
    %cst_11 = arith.constant 0.000000e+00 : f32
    %13 = vector.broadcast %cst_11 : f32 to vector<8x128xf32>
    %14 = arith.maximumf %12, %13 : vector<8x128xf32>
    %c0_12 = arith.constant 0 : index
    %c0_13 = arith.constant 0 : index
    %15 = vector.load %arg4[%c0_12, %c0_13] : memref<128x8xf32, #tpu.memory_space<vmem>>, vector<128x8xf32>
    %cst_14 = arith.constant dense<0.000000e+00> : vector<8x8xf32>
    %16 = tpu.matmul %14, %15, %cst_14 {dimension_numbers = #tpu.dot_dimension_numbers<[1], [0], [0], [1], [0, 0, 1, 1], [], []>} : vector<8x128xf32>, vector<128x8xf32>, vector<8x8xf32> -> vector<8x8xf32>
    %c0_15 = arith.constant 0 : index
    %c0_16 = arith.constant 0 : index
    %17 = vector.load %arg7[%c0_15, %c0_16] : memref<1x8xf32, #tpu.memory_space<vmem>>, vector<1x8xf32>
    %18 = vector.broadcast %17 : vector<1x8xf32> to vector<8x8xf32>
    %19 = arith.addf %16, %18 : vector<8x8xf32>
    %c0_17 = arith.constant 0 : index
    %c0_18 = arith.constant 0 : index
    %20 = vector.load %arg8[%c0_17, %c0_18] : memref<8x8xf32, #tpu.memory_space<vmem>>, vector<8x8xf32>
    tpu.vector_store %arg8[%c0_17, %c0_18], %19 {strides = array<i32>} : memref<8x8xf32, #tpu.memory_space<vmem>>, vector<8x8xf32>,
    return
  }
  func.func @transform_0(%arg0: i32) -> (i32, i32) {
    %c0_i32 = arith.constant 0 : i32
    %c0_i32_0 = arith.constant 0 : i32
    return %arg0, %c0_i32 : i32, i32
  }
  func.func @transform_1(%arg0: i32) -> (i32, i32) {
    %c0_i32 = arith.constant 0 : i32
    %c0_i32_0 = arith.constant 0 : i32
    %c0_i32_1 = arith.constant 0 : i32
    return %c0_i32, %c0_i32_0 : i32, i32
  }
  func.func @transform_2(%arg0: i32) -> (i32, i32) {
    %c0_i32 = arith.constant 0 : i32
    %c0_i32_0 = arith.constant 0 : i32
    %c0_i32_1 = arith.constant 0 : i32
    return %c0_i32, %c0_i32_0 : i32, i32
  }
  func.func @transform_3(%arg0: i32) -> (i32, i32) {
    %c0_i32 = arith.constant 0 : i32
    %c0_i32_0 = arith.constant 0 : i32
    %c0_i32_1 = arith.constant 0 : i32
    return %c0_i32, %c0_i32_0 : i32, i32
  }
  func.func @transform_4(%arg0: i32) -> (i32, i32) {
    %c0_i32 = arith.constant 0 : i32
    %c0_i32_0 = arith.constant 0 : i32
    %c0_i32_1 = arith.constant 0 : i32
    return %c0_i32, %c0_i32_0 : i32, i32
  }
  func.func @transform_5(%arg0: i32) -> (i32, i32) {
    %c0_i32 = arith.constant 0 : i32
    %c0_i32_0 = arith.constant 0 : i32
    %c0_i32_1 = arith.constant 0 : i32
    return %c0_i32, %c0_i32_0 : i32, i32
  }
  func.func @transform_6(%arg0: i32) -> (i32, i32) {
    %c0_i32 = arith.constant 0 : i32
    %c0_i32_0 = arith.constant 0 : i32
    %c0_i32_1 = arith.constant 0 : i32
    return %c0_i32, %c0_i32_0 : i32, i32
  }
  func.func @transform_7(%arg0: i32) -> (i32, i32) {
    %c0_i32 = arith.constant 0 : i32
    %c0_i32_0 = arith.constant 0 : i32
    return %arg0, %c0_i32 : i32, i32
  }
}

</mosaic_0001>

<llo_original>
// kernel: tpu_custom_call.1
$region0: #{tpu_custom_call.1}
  #allocation0 [shape = 'u32[]', space=smem, size = 0x4, offset = 0x4, fixed_abs, tag = 'smem constant byte address 0x4 - core index']
  #allocation1 [shape = 'u32[144,128]{1,0:T(1,128)}', space=vmem, size = 0x12000, scoped, tag = 'internal scratch']
  %s0 = inlined_call_operand.vmem [shape: f32[8,16], index: 0, kind: input, shape index: {}]
  %s1 = inlined_call_operand.hbm [shape: f32[16,128], index: 1, kind: input, shape index: {}]
  %s2 = inlined_call_operand.vmem [shape: f32[128,128], index: 2, kind: input, shape index: {}]
  %s3 = inlined_call_operand.vmem [shape: f32[128,8], index: 3, kind: input, shape index: {}]
  %s4 = inlined_call_operand.vmem [shape: f32[1,128], index: 4, kind: input, shape index: {}]
  %s5 = inlined_call_operand.vmem [shape: f32[1,128], index: 5, kind: input, shape index: {}]
  %s6 = inlined_call_operand.vmem [shape: f32[1,8], index: 6, kind: input, shape index: {}]
  %s7 = inlined_call_operand.hbm [shape: f32[8,8], index: 7, kind: output, shape index: {}]
  %s8 = sld [smem:[#allocation0]]
  $region42: #{tpu_custom_call.1} parent=0
    _
  %s10 = ssub.s32 1, %s8
  %s11 = scalar_select 0, %s10, %s8
  $region1: #{tpu_custom_call.1} parent=0
    #allocation2 [shape = 'u8[8192]{0}', space=vmem, size = 0x2000, scoped, tag = 'input window, operand 1, single buffered']
    #allocation3 [shape = 's32[1]{0}', space=sflag, size = 0x4, scoped, tag = 'scoped memory for tpu_custom_call.1']
    #allocation4 [shape = 's32[1]{0}', space=sflag, size = 0x4, scoped, tag = 'scoped memory for tpu_custom_call.1']
    #allocation5 [shape = 'u8[4096]{0}', space=vmem, size = 0x1000, scoped, tag = 'output window, operand 0, single buffered']
    %12 = vsyncpa [#allocation3], 0
    %13 = vsyncpa [#allocation4], 0
    // Predicated region
    $region2: #{tpu_custom_call.1} parent=1 // pred_check
      _
    $region3: #{tpu_custom_call.1} parent=1 // pred_check_branch
      %15 = sbr.rel (0) target = $region5
    $region4: #{tpu_custom_call.1} parent=1 // pred_region
      _
    $region5: #{tpu_custom_call.1} parent=1 // pred_fallthru
      _
    // Predicated region
    $region6: #{tpu_custom_call.1} parent=1 // pred_check
      _
    $region7: #{tpu_custom_call.1} parent=1 // pred_check_branch
      %17 = sbr.rel (0) target = $region9
    $region8: #{tpu_custom_call.1} parent=1 // pred_region
      %s19 = ssub.s32 256, 256
      %20 = vsyncadd [#allocation3], %s19
      %s21 = sshll.u32 [#allocation2], 4
      %s22 = int_to_ptr.vmem [resolvable:$true] %s21
      %27 = dma.hbm_to_vmem [thread:$0]  %s1, 256, %s22, [#allocation3], 128, 128, 8
    $region9: #{tpu_custom_call.1} parent=1 // pred_fallthru
      _
    // Predicated region
    $region10: #{tpu_custom_call.1} parent=1 // pred_check
      _
    $region11: #{tpu_custom_call.1} parent=1 // pred_check_branch
      %29 = sbr.rel (0) target = $region13
    $region12: #{tpu_custom_call.1} parent=1 // pred_region
      _
    $region13: #{tpu_custom_call.1} parent=1 // pred_fallthru
      _
    // Predicated region
    $region14: #{tpu_custom_call.1} parent=1 // pred_check
      _
    $region15: #{tpu_custom_call.1} parent=1 // pred_check_branch
      %31 = sbr.rel (0) target = $region17
    $region16: #{tpu_custom_call.1} parent=1 // pred_region
      _
    $region17: #{tpu_custom_call.1} parent=1 // pred_fallthru
      _
    // Predicated region
    $region18: #{tpu_custom_call.1} parent=1 // pred_check
      _
    $region19: #{tpu_custom_call.1} parent=1 // pred_check_branch
      %33 = sbr.rel (0) target = $region21
    $region20: #{tpu_custom_call.1} parent=1 // pred_region
      _
    $region21: #{tpu_custom_call.1} parent=1 // pred_fallthru
      _
    // Predicated region
    $region22: #{tpu_custom_call.1} parent=1 // pred_check
      _
    $region23: #{tpu_custom_call.1} parent=1 // pred_check_branch
      %35 = sbr.rel (0) target = $region25
    $region24: #{tpu_custom_call.1} parent=1 // pred_region
      _
    $region25: #{tpu_custom_call.1} parent=1 // pred_fallthru
      _
    // Predicated region
    $region26: #{tpu_custom_call.1} parent=1 // pred_check
      _
    $region27: #{tpu_custom_call.1} parent=1 // pred_check_branch
      %37 = sbr.rel (0) target = $region29
    $region28: #{tpu_custom_call.1} parent=1 // pred_region
      _
    $region29: #{tpu_custom_call.1} parent=1 // pred_fallthru
      _
    // Predicated region
    $region30: #{tpu_custom_call.1} parent=1 // pred_check
      _
    $region31: #{tpu_custom_call.1} parent=1 // pred_check_branch
      %39 = sbr.rel (0) target = $region33
    $region32: #{tpu_custom_call.1} parent=1 // pred_region
      %40 = dma.done [#allocation3], 256
    $region33: #{tpu_custom_call.1} parent=1 // pred_fallthru
      _
    %v41 = vld [vmem:[%s0] sm:$0xff]
    %v42 = vld [vmem:[#allocation2] sm:$0xff]
    %v43 = vld [vmem:[#allocation2 + $0x8] sm:$0xff]
    %v44 = vld [vmem:[%s4] sm:$0x1]
    %v46 = vlaneseq
    %v47 = vshrl.u32 %v46, 7
    %v48 = vsub.s32 0, %v47
    %v49 = vrot.slane %v44, %v48
    %vm51 = vcmask 130048
    %v53 = vsel %vm51, %v41, 0
    %55 = vmatprep.subr.mxu0 0.0
    %56 = vmatpush1.msra.mxu0 %v42
    %57 = vmatprep.subr.mxu0 0.0
    %58 = vmatpush1.msra.mxu0 %v43
    %59 = vmatprep.subr.mxu0 0.0
    %60 = vmatpush1.msra.mxu0 0.0
    %61 = vmatprep.subr.mxu0 0.0
    %62 = vmatpush1.msra.mxu0 0.0
    %63 = vmatprep.subr.mxu0 0.0
    %64 = vmatpush1.msra.mxu0 0.0
    %65 = vmatprep.subr.mxu0 0.0
    %66 = vmatpush1.msra.mxu0 0.0
    %67 = vmatprep.subr.mxu0 0.0
    %68 = vmatpush1.msra.mxu0 0.0
    %69 = vmatprep.subr.mxu0 0.0
    %70 = vmatpush1.msra.mxu0 0.0
    %71 = vmatprep.subr.mxu0 0.0
    %72 = vmatpush1.msra.mxu0 0.0
    %73 = vmatprep.subr.mxu0 0.0
    %74 = vmatpush1.msra.mxu0 0.0
    %75 = vmatprep.subr.mxu0 0.0
    %76 = vmatpush1.msra.mxu0 0.0
    %77 = vmatprep.subr.mxu0 0.0
    %78 = vmatpush1.msra.mxu0 0.0
    %79 = vmatprep.subr.mxu0 0.0
    %80 = vmatpush1.msra.mxu0 0.0
    %81 = vmatprep.subr.mxu0 0.0
    %82 = vmatpush1.msra.mxu0 0.0
    %83 = vmatprep.subr.mxu0 0.0
    %84 = vmatpush1.msra.mxu0 0.0
    %85 = vmatprep.subr.mxu0 0.0
    %86 = vmatpush1.msra.mxu0 0.0
    %87 = vmatprep.subr.mxu0 0.0
    %88 = vmatpush1.msra.mxu0 0.0
    %89 = vmatprep.subr.mxu0 0.0
    %90 = vmatpush1.msra.mxu0 0.0
    %91 = vmatprep.subr.mxu0 0.0
    %92 = vmatpush1.msra.mxu0 0.0
    %93 = vmatprep.subr.mxu0 0.0
    %94 = vmatpush1.msra.mxu0 0.0
    %95 = vmatprep.subr.mxu0 0.0
    %96 = vmatpush1.msra.mxu0 0.0
    %97 = vmatprep.subr.mxu0 0.0
    %98 = vmatpush1.msra.mxu0 0.0
    %99 = vmatprep.subr.mxu0 0.0
    %100 = vmatpush1.msra.mxu0 0.0
    %101 = vmatprep.subr.mxu0 0.0
    %102 = vmatpush1.msra.mxu0 0.0
    %103 = vmatprep.subr.mxu0 0.0
    %104 = vmatpush1.msra.mxu0 0.0
    %105 = vmatprep.subr.mxu0 0.0
    %106 = vmatpush1.msra.mxu0 0.0
    %107 = vmatprep.subr.mxu0 0.0
    %108 = vmatpush1.msra.mxu0 0.0
    %109 = vmatprep.subr.mxu0 0.0
    %110 = vmatpush1.msra.mxu0 0.0
    %111 = vmatprep.subr.mxu0 0.0
    %112 = vmatpush1.msra.mxu0 0.0
    %113 = vmatprep.subr.mxu0 0.0
    %114 = vmatpush1.msra.mxu0 0.0
    %115 = vmatprep.subr.mxu0 0.0
    %116 = vmatpush1.msra.mxu0 0.0
    %117 = vmatprep.subr.mxu0 0.0
    %118 = vmatpush1.msra.mxu0 0.0
    %119 = vmatprep.mubr.f32.mxu0 0.0
    %120 = vmatmul.mubr.f32.gmra.mrb[0].mxu0 %v53
    %v121 = vpop.f32.mrb[0].mxu0
    %v122 = vadd.f32 %v49, %v121
    %v123 = vpop.f32.mrb[0].mxu0
    %124 = vdwg.mxu0
    %v125 = vmax.f32 %v122, 0.0
    %v126 = vld [vmem:[%s2] sm:$0xff]
    %v127 = vld [vmem:[%s2 + $0x8] sm:$0xff]
    %v128 = vld [vmem:[%s2 + $0x10] sm:$0xff]
    %v129 = vld [vmem:[%s2 + $0x18] sm:$0xff]
    %v130 = vld [vmem:[%s2 + $0x20] sm:$0xff]
    %v131 = vld [vmem:[%s2 + $0x28] sm:$0xff]
    %v132 = vld [vmem:[%s2 + $0x30] sm:$0xff]
    %v133 = vld [vmem:[%s2 + $0x38] sm:$0xff]
    %v134 = vld [vmem:[%s2 + $0x40] sm:$0xff]
    %v135 = vld [vmem:[%s2 + $0x48] sm:$0xff]
    %v136 = vld [vmem:[%s2 + $0x50] sm:$0xff]
    %v137 = vld [vmem:[%s2 + $0x58] sm:$0xff]
    %v138 = vld [vmem:[%s2 + $0x60] sm:$0xff]
    %v139 = vld [vmem:[%s2 + $0x68] sm:$0xff]
    %v140 = vld [vmem:[%s2 + $0x70] sm:$0xff]
    %v141 = vld [vmem:[%s2 + $0x78] sm:$0xff]
    %v142 = vld [vmem:[%s5] sm:$0x1]
    %v144 = vlaneseq
    %v145 = vshrl.u32 %v144, 7
    %v146 = vsub.s32 0, %v145
    %v147 = vrot.slane %v142, %v146
    %149 = vmatprep.subr.mxu0 0.0
    %150 = vmatpush1.msra.mxu0 %v126
    %151 = vmatprep.subr.mxu0 0.0
    %152 = vmatpush1.msra.mxu0 %v127
    %153 = vmatprep.subr.mxu0 0.0
    %154 = vmatpush1.msra.mxu0 %v128
    %155 = vmatprep.subr.mxu0 0.0
    %156 = vmatpush1.msra.mxu0 %v129
    %157 = vmatprep.subr.mxu0 0.0
    %158 = vmatpush1.msra.mxu0 %v130
    %159 = vmatprep.subr.mxu0 0.0
    %160 = vmatpush1.msra.mxu0 %v131
    %161 = vmatprep.subr.mxu0 0.0
    %162 = vmatpush1.msra.mxu0 %v132
    %163 = vmatprep.subr.mxu0 0.0
    %164 = vmatpush1.msra.mxu0 %v133
    %165 = vmatprep.subr.mxu0 0.0
    %166 = vmatpush1.msra.mxu0 %v134
    %167 = vmatprep.subr.mxu0 0.0
    %168 = vmatpush1.msra.mxu0 %v135
    %169 = vmatprep.subr.mxu0 0.0
    %170 = vmatpush1.msra.mxu0 %v136
    %171 = vmatprep.subr.mxu0 0.0
    %172 = vmatpush1.msra.mxu0 %v137
    %173 = vmatprep.subr.mxu0 0.0
    %174 = vmatpush1.msra.mxu0 %v138
    %175 = vmatprep.subr.mxu0 0.0
    %176 = vmatpush1.msra.mxu0 %v139
    %177 = vmatprep.subr.mxu0 0.0
    %178 = vmatpush1.msra.mxu0 %v140
    %179 = vmatprep.subr.mxu0 0.0
    %180 = vmatpush1.msra.mxu0 %v141
    %181 = vmatprep.subr.mxu0 0.0
    %182 = vmatpush1.msra.mxu0 0.0
    %183 = vmatprep.subr.mxu0 0.0
    %184 = vmatpush1.msra.mxu0 0.0
    %185 = vmatprep.subr.mxu0 0.0
    %186 = vmatpush1.msra.mxu0 0.0
    %187 = vmatprep.subr.mxu0 0.0
    %188 = vmatpush1.msra.mxu0 0.0
    %189 = vmatprep.subr.mxu0 0.0
    %190 = vmatpush1.msra.mxu0 0.0
    %191 = vmatprep.subr.mxu0 0.0
    %192 = vmatpush1.msra.mxu0 0.0
    %193 = vmatprep.subr.mxu0 0.0
    %194 = vmatpush1.msra.mxu0 0.0
    %195 = vmatprep.subr.mxu0 0.0
    %196 = vmatpush1.msra.mxu0 0.0
    %197 = vmatprep.subr.mxu0 0.0
    %198 = vmatpush1.msra.mxu0 0.0
    %199 = vmatprep.subr.mxu0 0.0
    %200 = vmatpush1.msra.mxu0 0.0
    %201 = vmatprep.subr.mxu0 0.0
    %202 = vmatpush1.msra.mxu0 0.0
    %203 = vmatprep.subr.mxu0 0.0
    %204 = vmatpush1.msra.mxu0 0.0
    %205 = vmatprep.subr.mxu0 0.0
    %206 = vmatpush1.msra.mxu0 0.0
    %207 = vmatprep.subr.mxu0 0.0
    %208 = vmatpush1.msra.mxu0 0.0
    %209 = vmatprep.subr.mxu0 0.0
    %210 = vmatpush1.msra.mxu0 0.0
    %211 = vmatprep.subr.mxu0 0.0
    %212 = vmatpush1.msra.mxu0 0.0
    %213 = vmatprep.mubr.f32.mxu0 0.0
    %214 = vmatmul.mubr.f32.gmra.mrb[0].mxu0 %v125
    %v215 = vpop.f32.mrb[0].mxu0
    %v216 = vadd.f32 %v147, %v215
    %v217 = vpop.f32.mrb[0].mxu0
    %218 = vdwg.mxu0
    %v219 = vmax.f32 %v216, 0.0
    %v220 = vld [vmem:[%s3] sm:$0xff]
    %v221 = vld [vmem:[%s3 + $0x8] sm:$0xff]
    %v222 = vld [vmem:[%s3 + $0x10] sm:$0xff]
    %v223 = vld [vmem:[%s3 + $0x18] sm:$0xff]
    %v224 = vld [vmem:[%s3 + $0x20] sm:$0xff]
    %v225 = vld [vmem:[%s3 + $0x28] sm:$0xff]
    %v226 = vld [vmem:[%s3 + $0x30] sm:$0xff]
    %v227 = vld [vmem:[%s3 + $0x38] sm:$0xff]
    %v228 = vld [vmem:[%s3 + $0x40] sm:$0xff]
    %v229 = vld [vmem:[%s3 + $0x48] sm:$0xff]
    %v230 = vld [vmem:[%s3 + $0x50] sm:$0xff]
    %v231 = vld [vmem:[%s3 + $0x58] sm:$0xff]
    %v232 = vld [vmem:[%s3 + $0x60] sm:$0xff]
    %v233 = vld [vmem:[%s3 + $0x68] sm:$0xff]
    %v234 = vld [vmem:[%s3 + $0x70] sm:$0xff]
    %v235 = vld [vmem:[%s3 + $0x78] sm:$0xff]
    %v236 = vld [vmem:[%s6] sm:$0x1]
    %v238 = vlaneseq
    %v239 = vshrl.u32 %v238, 7
    %v240 = vsub.s32 0, %v239
    %v241 = vrot.slane %v236, %v240
    %243 = vmatprep.subr.mxu0 0.0
    %244 = vmatpush1.msra.mxu0 %v220
    %245 = vmatprep.subr.mxu0 0.0
    %246 = vmatpush1.msra.mxu0 %v221
    %247 = vmatprep.subr.mxu0 0.0
    %248 = vmatpush1.msra.mxu0 %v222
    %249 = vmatprep.subr.mxu0 0.0
    %250 = vmatpush1.msra.mxu0 %v223
    %251 = vmatprep.subr.mxu0 0.0
    %252 = vmatpush1.msra.mxu0 %v224
    %253 = vmatprep.subr.mxu0 0.0
    %254 = vmatpush1.msra.mxu0 %v225
    %255 = vmatprep.subr.mxu0 0.0
    %256 = vmatpush1.msra.mxu0 %v226
    %257 = vmatprep.subr.mxu0 0.0
    %258 = vmatpush1.msra.mxu0 %v227
    %259 = vmatprep.subr.mxu0 0.0
    %260 = vmatpush1.msra.mxu0 %v228
    %261 = vmatprep.subr.mxu0 0.0
    %262 = vmatpush1.msra.mxu0 %v229
    %263 = vmatprep.subr.mxu0 0.0
    %264 = vmatpush1.msra.mxu0 %v230
    %265 = vmatprep.subr.mxu0 0.0
    %266 = vmatpush1.msra.mxu0 %v231
    %267 = vmatprep.subr.mxu0 0.0
    %268 = vmatpush1.msra.mxu0 %v232
    %269 = vmatprep.subr.mxu0 0.0
    %270 = vmatpush1.msra.mxu0 %v233
    %271 = vmatprep.subr.mxu0 0.0
    %272 = vmatpush1.msra.mxu0 %v234
    %273 = vmatprep.subr.mxu0 0.0
    %274 = vmatpush1.msra.mxu0 %v235
    %275 = vmatprep.subr.mxu0 0.0
    %276 = vmatpush1.msra.mxu0 0.0
    %277 = vmatprep.subr.mxu0 0.0
    %278 = vmatpush1.msra.mxu0 0.0
    %279 = vmatprep.subr.mxu0 0.0
    %280 = vmatpush1.msra.mxu0 0.0
    %281 = vmatprep.subr.mxu0 0.0
    %282 = vmatpush1.msra.mxu0 0.0
    %283 = vmatprep.subr.mxu0 0.0
    %284 = vmatpush1.msra.mxu0 0.0
    %285 = vmatprep.subr.mxu0 0.0
    %286 = vmatpush1.msra.mxu0 0.0
    %287 = vmatprep.subr.mxu0 0.0
    %288 = vmatpush1.msra.mxu0 0.0
    %289 = vmatprep.subr.mxu0 0.0
    %290 = vmatpush1.msra.mxu0 0.0
    %291 = vmatprep.subr.mxu0 0.0
    %292 = vmatpush1.msra.mxu0 0.0
    %293 = vmatprep.subr.mxu0 0.0
    %294 = vmatpush1.msra.mxu0 0.0
    %295 = vmatprep.subr.mxu0 0.0
    %296 = vmatpush1.msra.mxu0 0.0
    %297 = vmatprep.subr.mxu0 0.0
    %298 = vmatpush1.msra.mxu0 0.0
    %299 = vmatprep.subr.mxu0 0.0
    %300 = vmatpush1.msra.mxu0 0.0
    %301 = vmatprep.subr.mxu0 0.0
    %302 = vmatpush1.msra.mxu0 0.0
    %303 = vmatprep.subr.mxu0 0.0
    %304 = vmatpush1.msra.mxu0 0.0
    %305 = vmatprep.subr.mxu0 0.0
    %306 = vmatpush1.msra.mxu0 0.0
    %307 = vmatprep.mubr.f32.mxu0 0.0
    %308 = vmatmul.mubr.f32.gmra.mrb[0].mxu0 %v219
    %v309 = vpop.f32.mrb[0].mxu0
    %v310 = vadd.f32 %v241, %v309
    %v311 = vpop.f32.mrb[0].mxu0
    %312 = vdwg.mxu0
    %vm313 = vcmask 64512
    %314 = vst.msk [vmem:[#allocation5] sm:$0xff] %vm313, %v310
    // Predicated region
    $region34: #{tpu_custom_call.1} parent=1 // pred_check
      _
    $region35: #{tpu_custom_call.1} parent=1 // pred_check_branch
      %316 = sbr.rel (0) target = $region37
    $region36: #{tpu_custom_call.1} parent=1 // pred_region
      %s318 = ssub.s32 128, 128
      %319 = vsyncadd [#allocation4], %s318
      %s321 = sshll.u32 [#allocation5], 4
      %s322 = int_to_ptr.vmem [resolvable:$true] %s321
      %324 = dma.vmem_to_hbm [thread:$0]  %s322, 128, %s7, [#allocation4]
    $region37: #{tpu_custom_call.1} parent=1 // pred_fallthru
      _
    // Predicated region
    $region38: #{tpu_custom_call.1} parent=1 // pred_check
      _
    $region39: #{tpu_custom_call.1} parent=1 // pred_check_branch
      %326 = sbr.rel (0) target = $region41
    $region40: #{tpu_custom_call.1} parent=1 // pred_region
      %327 = dma.done [#allocation4], 128
    $region41: #{tpu_custom_call.1} parent=1 // pred_fallthru
      _
    %328 = vsyncpa [#allocation3], 1
    %329 = vsyncpa [#allocation4], 1

</llo_original>
